<compile_context>
chip_gen: v5e
topology: v5e:2x2
jax: 0.10.0
libtpu: 0.0.40
codegen_flags: <defaults>
</compile_context>

<pallas_src>
import jax
import jax.numpy as jnp
from jax.experimental import pallas as pl
from jax.experimental.pallas import tpu as pltpu


def _baseline_fc_relu_kernel(h_ref, w_ref, b_ref, o_ref):
    # h_ref: (H, bm) VMEM  -- activations, lane-dense in the row/batch axis
    # w_ref: (O, H)  VMEM  -- PyTorch nn.Linear layout, grid-invariant
    # b_ref: (O, 1)  VMEM  -- bias column, grid-invariant
    # o_ref: (O, bm) VMEM  -- lane-dense output tile
    #
    # Standard A@B contraction (contraction dim is LHS-minor / RHS-major), so
    # no implicit XLU transpose is needed.  f32 accumulate.  With O=1, K=32
    # the MXU is nearly idle, but the workload is overhead/layout-bound, not
    # compute-bound.
    y = jnp.dot(w_ref[...], h_ref[...], preferred_element_type=jnp.float32)
    # One vectorized bias add + ReLU and a single dense full-block store
    # (works for any output_size; no per-row masked stores).
    o_ref[...] = jnp.maximum(y + b_ref[...], 0.0).astype(o_ref.dtype)


def baseline_network_forward(h_t, weight, bias, *, block_m=8192):
    """relu(h_t @ weight.T + bias) via one tiled pallas_call.

    h_t:    (..., H) -- hidden state(s); leading dims may include a rollout
                        timestep axis and/or batch axis.
    weight: (O, H)   -- PyTorch nn.Linear layout (fc.weight).
    bias:   (O,)     -- fc.bias.
    returns (..., O) float32
    """
    lead_shape = h_t.shape[:-1]
    H = h_t.shape[-1]
    O = weight.shape[0]
    f32 = jnp.float32

    h2 = h_t.reshape(-1, H)
    if h2.dtype != f32:
        h2 = h2.astype(f32)
    M = h2.shape[0]
    hT = h2.T  # (H, M): rows/timesteps land on lanes -> lane-dense tiles

    w = weight if weight.dtype == f32 else weight.astype(f32)
    b = bias if bias.dtype == f32 else bias.astype(f32)
    b_col = b.reshape(O, 1)

    # Row-tile choice (workload is per-grid-step-overhead bound):
    #  * small M: ONE full-extent block (no 128-rounding, no padding, grid=(1,))
    #  * large M: tiles of up to `block_m` rows (multiple of 128), and at least
    #    2 grid steps so ("parallel",) can shard across v7x's two TensorCores.
    block_m = max(128, (block_m // 128) * 128)
    if M <= min(block_m, 2048):
        bm = M
    else:
        half = ((-(-M // 2)) + 127) // 128 * 128  # ceil(M/2) rounded up to 128
        bm = min(block_m, half)
    grid = (pl.cdiv(M, bm),)

    out = pl.pallas_call(
        _baseline_fc_relu_kernel,
        out_shape=jax.ShapeDtypeStruct((O, M), f32),
        grid=grid,
        in_specs=[
            pl.BlockSpec((H, bm), lambda i: (0, i)),  # activation column tile
            pl.BlockSpec((O, H), lambda i: (0, 0)),   # weight (grid-invariant)
            pl.BlockSpec((O, 1), lambda i: (0, 0)),   # bias column (grid-invariant)
        ],
        out_specs=pl.BlockSpec((O, bm), lambda i: (0, i)),
        compiler_params=pltpu.CompilerParams(
            dimension_semantics=("parallel",),        # split M across TCs (v7x)
        ),
    )(hT, w, b_col)

    # (O, M) -> (..., O).  For O == 1 this is a pure reshape (no transpose copy).
    if O == 1:
        return out[0].reshape(lead_shape + (1,))
    return out.T.reshape(lead_shape + (O,))


def reference_forward(h, weight, bias):
    return jnp.maximum(jnp.einsum("...h,oh->...o", h, weight) + bias, 0.0)


if __name__ == "__main__":
    INPUT_SIZE, OUTPUT_SIZE = 32, 1
    T, B = 16, 8  # small rollout: 16 timesteps, batch 8

    key = jax.random.PRNGKey(0)
    k_h, k_w, k_b, k_r = jax.random.split(key, 4)

    bound = 1.0 / (INPUT_SIZE ** 0.5)  # mimics nn.Linear init range
    weight = jax.random.uniform(
        k_w, (OUTPUT_SIZE, INPUT_SIZE), minval=-bound, maxval=bound,
        dtype=jnp.float32)
    bias = jax.random.uniform(
        k_b, (OUTPUT_SIZE,), minval=-bound, maxval=bound, dtype=jnp.float32)

    # (1) Batched rollout: all T*B rows handled by a single grid step.
    h_roll = jax.random.normal(k_h, (T, B, INPUT_SIZE), dtype=jnp.float32)
    b_roll = jax.block_until_ready(baseline_network_forward(h_roll, weight, bias))
    ref_roll = reference_forward(h_roll, weight, bias)
    assert b_roll.shape == (T, B, OUTPUT_SIZE)
    assert jnp.allclose(b_roll, ref_roll, atol=1e-5, rtol=1e-5)

    # (2) Single-timestep call, matching the PyTorch module signature exactly.
    h_t = h_roll[0]                      # (B, input_size)
    b_t = jax.block_until_ready(baseline_network_forward(h_t, weight, bias))
    assert b_t.shape == (B, OUTPUT_SIZE)
    assert jnp.allclose(b_t, ref_roll[0], atol=1e-5, rtol=1e-5)

    # (3) Tiled + ragged path (forced small block_m): grid > 1 with a partial
    #     boundary block, no jnp.pad -- Pallas masks the out-of-range columns.
    h_big = jax.random.normal(k_r, (260, INPUT_SIZE), dtype=jnp.float32)
    b_big = jax.block_until_ready(
        baseline_network_forward(h_big, weight, bias, block_m=128))
    ref_big = reference_forward(h_big, weight, bias)
    assert b_big.shape == (260, OUTPUT_SIZE)
    assert jnp.allclose(b_big, ref_big, atol=1e-5, rtol=1e-5)

    print("KERNEL_OK")
</pallas_src>

<mosaic_0001>
module attributes {stable_mosaic.version = 11 : i64} {
  func.func @_baseline_fc_relu_kernel(%arg0: i32, %arg1: memref<32x128xf32, #tpu.memory_space<vmem>>, %arg2: memref<1x32xf32, #tpu.memory_space<vmem>>, %arg3: memref<1x1xf32, #tpu.memory_space<vmem>>, %arg4: memref<1x128xf32, #tpu.memory_space<vmem>>) attributes {dimension_semantics = [#tpu.dimension_semantics<parallel>], iteration_bounds = array<i64: 1>, scalar_prefetch = 0 : i64, scratch_operands = 0 : i64, tpu.core_type = #tpu.core_type<tc>, window_params = [{transform_indices = @transform_0, window_bounds = array<i64: 32, 128>}, {pipeline_mode = #tpu.pipeline_mode<synchronous>, transform_indices = @transform_1, window_bounds = array<i64: 1, 32>}, {pipeline_mode = #tpu.pipeline_mode<synchronous>, transform_indices = @transform_2, window_bounds = array<i64: 1, 1>}, {transform_indices = @transform_3, window_bounds = array<i64: 1, 128>}]} {
    %c0 = arith.constant 0 : index
    %c0_0 = arith.constant 0 : index
    %0 = vector.load %arg2[%c0, %c0_0] : memref<1x32xf32, #tpu.memory_space<vmem>>, vector<1x32xf32>
    %c0_1 = arith.constant 0 : index
    %c0_2 = arith.constant 0 : index
    %1 = vector.load %arg1[%c0_1, %c0_2] : memref<32x128xf32, #tpu.memory_space<vmem>>, vector<32x128xf32>
    %cst = arith.constant dense<0.000000e+00> : vector<1x128xf32>
    %2 = tpu.matmul %0, %1, %cst {dimension_numbers = #tpu.dot_dimension_numbers<[1], [0], [0], [1], [0, 0, 1, 1], [], []>} : vector<1x32xf32>, vector<32x128xf32>, vector<1x128xf32> -> vector<1x128xf32>
    %c0_3 = arith.constant 0 : index
    %c0_4 = arith.constant 0 : index
    %3 = vector.load %arg3[%c0_3, %c0_4] : memref<1x1xf32, #tpu.memory_space<vmem>>, vector<1x1xf32>
    %4 = vector.broadcast %3 : vector<1x1xf32> to vector<1x128xf32>
    %5 = arith.addf %2, %4 : vector<1x128xf32>
    %cst_5 = arith.constant 0.000000e+00 : f32
    %6 = vector.broadcast %cst_5 : f32 to vector<1x128xf32>
    %7 = arith.maximumf %5, %6 : vector<1x128xf32>
    %c0_6 = arith.constant 0 : index
    %c0_7 = arith.constant 0 : index
    %8 = vector.load %arg4[%c0_6, %c0_7] : memref<1x128xf32, #tpu.memory_space<vmem>>, vector<1x128xf32>
    tpu.vector_store %arg4[%c0_6, %c0_7], %7 {strides = array<i32>} : memref<1x128xf32, #tpu.memory_space<vmem>>, vector<1x128xf32>,
    return
  }
  func.func @transform_0(%arg0: i32) -> (i32, i32) {
    %c0_i32 = arith.constant 0 : i32
    %c0_i32_0 = arith.constant 0 : i32
    return %c0_i32, %arg0 : i32, i32
  }
  func.func @transform_1(%arg0: i32) -> (i32, i32) {
    %c0_i32 = arith.constant 0 : i32
    %c0_i32_0 = arith.constant 0 : i32
    %c0_i32_1 = arith.constant 0 : i32
    return %c0_i32, %c0_i32_0 : i32, i32
  }
  func.func @transform_2(%arg0: i32) -> (i32, i32) {
    %c0_i32 = arith.constant 0 : i32
    %c0_i32_0 = arith.constant 0 : i32
    %c0_i32_1 = arith.constant 0 : i32
    return %c0_i32, %c0_i32_0 : i32, i32
  }
  func.func @transform_3(%arg0: i32) -> (i32, i32) {
    %c0_i32 = arith.constant 0 : i32
    %c0_i32_0 = arith.constant 0 : i32
    return %c0_i32, %arg0 : i32, i32
  }
}

</mosaic_0001>

<llo_original>
// kernel: tpu_custom_call.1
$region0: #{tpu_custom_call.1}
  #allocation0 [shape = 'u32[]', space=smem, size = 0x4, offset = 0x4, fixed_abs, tag = 'smem constant byte address 0x4 - core index']
  #allocation1 [shape = 'u32[72,128]{1,0:T(1,128)}', space=vmem, size = 0x9000, scoped, tag = 'internal scratch']
  #allocation2 [shape = 'f32[1,1]{1,0:T(1,128)S(1)}', space=vmem, size = 0x200, scoped, tag = 'scoped memory for tpu_custom_call.1']
  %s0 = inlined_call_operand.hbm [shape: f32[32,128], index: 0, kind: input, shape index: {}]
  %s1 = inlined_call_operand.vmem [shape: f32[1,32], index: 1, kind: input, shape index: {}]
  %s2 = inlined_call_operand.<no memory space> [shape: f32[1,1], index: 2, kind: input, shape index: {}]
  %s3 = inlined_call_operand.hbm [shape: f32[1,128], index: 3, kind: output, shape index: {}]
  %s4 = sld [smem:[#allocation0]]
  $region26: #{tpu_custom_call.1} parent=0
    _
  %s6 = ssub.s32 1, %s4
  %s7 = scalar_select 0, %s6, %s4
  %v8 = vstv %s2
  %9 = vst [vmem:[#allocation2] sm:$0x1] %v8
  $region1: #{tpu_custom_call.1} parent=0
    #allocation3 [shape = 'u8[16384]{0}', space=vmem, size = 0x4000, scoped, tag = 'input window, operand 0, single buffered']
    #allocation4 [shape = 's32[1]{0}', space=sflag, size = 0x4, scoped, tag = 'scoped memory for tpu_custom_call.1']
    #allocation5 [shape = 's32[1]{0}', space=sflag, size = 0x4, scoped, tag = 'scoped memory for tpu_custom_call.1']
    #allocation6 [shape = 'u8[512]{0}', space=vmem, size = 0x400, scoped, tag = 'output window, operand 0, single buffered']
    %10 = vsyncpa [#allocation4], 0
    %11 = vsyncpa [#allocation5], 0
    // Predicated region
    $region2: #{tpu_custom_call.1} parent=1 // pred_check
      _
    $region3: #{tpu_custom_call.1} parent=1 // pred_check_branch
      %13 = sbr.rel (0) target = $region5
    $region4: #{tpu_custom_call.1} parent=1 // pred_region
      %15 = vsyncadd [#allocation4], 0
      %s16 = sshll.u32 %s0, 4
      %s17 = int_to_ptr.hbm [resolvable:$true] %s16
      %s18 = sshll.u32 [#allocation3], 4
      %s19 = int_to_ptr.vmem [resolvable:$true] %s18
      %24 = dma.hbm_to_vmem [thread:$0]  %s17, 512, %s19, [#allocation4], 128, 128, 8
    $region5: #{tpu_custom_call.1} parent=1 // pred_fallthru
      _
    // Predicated region
    $region6: #{tpu_custom_call.1} parent=1 // pred_check
      _
    $region7: #{tpu_custom_call.1} parent=1 // pred_check_branch
      %26 = sbr.rel (0) target = $region9
    $region8: #{tpu_custom_call.1} parent=1 // pred_region
      _
    $region9: #{tpu_custom_call.1} parent=1 // pred_fallthru
      _
    // Predicated region
    $region10: #{tpu_custom_call.1} parent=1 // pred_check
      _
    $region11: #{tpu_custom_call.1} parent=1 // pred_check_branch
      %28 = sbr.rel (0) target = $region13
    $region12: #{tpu_custom_call.1} parent=1 // pred_region
      _
    $region13: #{tpu_custom_call.1} parent=1 // pred_fallthru
      _
    // Predicated region
    $region14: #{tpu_custom_call.1} parent=1 // pred_check
      _
    $region15: #{tpu_custom_call.1} parent=1 // pred_check_branch
      %30 = sbr.rel (0) target = $region17
    $region16: #{tpu_custom_call.1} parent=1 // pred_region
      %32 = dma.done [#allocation4], 512
    $region17: #{tpu_custom_call.1} parent=1 // pred_fallthru
      _
    %v33 = vld [vmem:[%s1] sm:$0x1]
    %v34 = vld [vmem:[#allocation3] sm:$0xff]
    %v35 = vld [vmem:[#allocation3 + $0x8] sm:$0xff]
    %v36 = vld [vmem:[#allocation3 + $0x10] sm:$0xff]
    %v37 = vld [vmem:[#allocation3 + $0x18] sm:$0xff]
    %v38 = vld [vmem:[#allocation2] sm:$0x1]
    %40 = vset.pattern.permute.xlu0 0
    %41 = vperm.xlu0 %40, %v38
    %v42 = vpop.permute.xlu0 %41
    %v44 = vperm.slane %v42, 0
    %vm45 = vcmask 261120
    %v47 = vsel %vm45, %v33, 0
    %49 = vmatpush.msra.mxu0 0.0
    %50 = vmatpush.msra.mxu0 0.0
    %51 = vmatpush.msra.mxu0 0.0
    %52 = vmatpush.msra.mxu0 0.0
    %53 = vmatpush.msra.mxu0 0.0
    %54 = vmatpush.msra.mxu0 0.0
    %55 = vmatpush.msra.mxu0 0.0
    %56 = vmatpush.msra.mxu0 0.0
    %57 = vmatpush.msra.mxu0 0.0
    %58 = vmatpush.msra.mxu0 0.0
    %59 = vmatpush.msra.mxu0 0.0
    %60 = vmatpush.msra.mxu0 0.0
    %61 = vmatpush.msra.mxu0 %v37
    %62 = vmatpush.msra.mxu0 %v36
    %63 = vmatpush.msra.mxu0 %v35
    %64 = vmatpush.msra.mxu0 %v34
    %65 = vmatmul.f32.gmra.mxu0 %v47
    %v66 = vpop.f32.mrf.mxu0
    %v67 = vadd.f32 %v44, %v66
    %68 = vdwg.mxu0
    %v69 = vmax.f32 %v67, 0.0
    %70 = vst [vmem:[#allocation6] sm:$0x1] %v69
    // Predicated region
    $region18: #{tpu_custom_call.1} parent=1 // pred_check
      _
    $region19: #{tpu_custom_call.1} parent=1 // pred_check_branch
      %72 = sbr.rel (0) target = $region21
    $region20: #{tpu_custom_call.1} parent=1 // pred_region
      %74 = vsyncadd [#allocation5], 0
      %s76 = sshll.u32 [#allocation6], 4
      %s77 = int_to_ptr.vmem [resolvable:$true] %s76
      %s78 = sshll.u32 %s3, 4
      %s79 = int_to_ptr.hbm [resolvable:$true] %s78
      %81 = dma.vmem_to_hbm [thread:$0]  %s77, 16, %s79, [#allocation5]
    $region21: #{tpu_custom_call.1} parent=1 // pred_fallthru
      _
    // Predicated region
    $region22: #{tpu_custom_call.1} parent=1 // pred_check
      _
    $region23: #{tpu_custom_call.1} parent=1 // pred_check_branch
      %83 = sbr.rel (0) target = $region25
    $region24: #{tpu_custom_call.1} parent=1 // pred_region
      %85 = dma.done [#allocation5], 16
    $region25: #{tpu_custom_call.1} parent=1 // pred_fallthru
      _
    %86 = vsyncpa [#allocation4], 1
    %87 = vsyncpa [#allocation5], 1

</llo_original>
